<compile_context>
chip_gen: v7x
topology: tpu7x:2x2x1
jax: 0.10.0
libtpu: 0.0.40
codegen_flags: <defaults>
</compile_context>

<pallas_src>
import functools
import numpy as np
import jax
import jax.numpy as jnp
from jax.experimental import pallas as pl
from jax.experimental.pallas import tpu as pltpu

LEAKY_SLOPE = 0.01  # nn.LeakyReLU default
TB_MAX = 512        # max batch tile (review: sweep 256-512; 512 well inside VMEM)
ROW_ALIGN = 16      # sublane alignment that is safe for both bf16 and f32 tiles


def _round_up(n, m):
    return ((n + m - 1) // m) * m


# --------------------------------------------------------------------------
# Kernel: one batch tile of TB rows; all weight lane dims padded to 128.
# --------------------------------------------------------------------------
def _dsac_kernel(h2p, n_actions,
                 x_ref, w1_ref, b1_ref, w2_ref, b2_ref,
                 wac_ref, bac_ref, wa2_ref, ba2_ref,
                 wr_ref, br_ref, wc2_ref, bc2_ref,
                 out_ref):
    leaky = lambda t: jnp.maximum(t, LEAKY_SLOPE * t)
    bf16 = jnp.bfloat16

    x = x_ref[...]                                                       # (TB, Din) bf16

    # common: Linear(Din, H/2) + LeakyReLU ; Linear(H/2, H) + LeakyReLU
    h1 = leaky(jnp.dot(x, w1_ref[...], preferred_element_type=jnp.float32)
               + b1_ref[...]).astype(bf16)                               # (TB, H2_P)
    h2 = leaky(jnp.dot(h1, w2_ref[...], preferred_element_type=jnp.float32)
               + b2_ref[...]).astype(bf16)                               # (TB, H_P)

    # fused actor-hidden + critic1 (both Linear(H, H/2) + LeakyReLU)
    ac = leaky(jnp.dot(h2, wac_ref[...], preferred_element_type=jnp.float32)
               + bac_ref[...])                                           # (TB, 2*H2_P) f32
    a1 = ac[:, :h2p].astype(bf16)                                        # actor hidden (bf16)
    c1 = ac[:, h2p:]                                                     # critic1 (f32)

    # actor head + softmax (padded action lanes carry a -1e30 bias -> prob 0)
    logits = jnp.dot(a1, wa2_ref[...],
                     preferred_element_type=jnp.float32) + ba2_ref[...]  # (TB, OUT_P)
    m = jnp.max(logits, axis=-1, keepdims=True)
    e = jnp.exp(logits - m)
    s = jnp.sum(e, axis=-1, keepdims=True)
    policy = e * pl.reciprocal(s, approx=True)                           # (TB, OUT_P) f32

    # residual: Linear(A, H/2) + LeakyReLU on the policy distribution
    r = leaky(jnp.dot(policy.astype(bf16), wr_ref[...],
                      preferred_element_type=jnp.float32) + br_ref[...]) # (TB, H2_P) f32

    # value = critic2(relu(critic1 + residual))
    # Value head has 1 real output column -> VPU multiply + XLU lane reduction,
    # not an MXU matmul.
    pre = jnp.maximum(c1 + r, 0.0)                                       # (TB, H2_P) f32
    val = (jnp.sum(pre * wc2_ref[...], axis=-1, keepdims=True)
           + bc2_ref[...][:, :1])                                        # (TB, 1) f32

    # Single lane-dense store: value packed into padded policy lane `n_actions`
    # (that lane's softmax prob is exactly 0 thanks to the -1e30 bias fill).
    lane = jax.lax.broadcasted_iota(jnp.int32, out_ref.shape, 1)
    out_ref[...] = jnp.where(lane == n_actions, val, policy)


# --------------------------------------------------------------------------
# Parameter construction (raw f32, PyTorch Linear layout) and packing.
# --------------------------------------------------------------------------
def init_params(key, num_inputs, num_actions, hidden_size):
    # TODO(synk): utils.init_weights is not available; use PyTorch-default
    # uniform(-1/sqrt(fan_in), 1/sqrt(fan_in)) init instead.
    h2 = hidden_size // 2
    ks = jax.random.split(key, 14)

    def u(k, shape, fan_in):
        b = 1.0 / np.sqrt(fan_in)
        return jax.random.uniform(k, shape, jnp.float32, -b, b)

    return dict(
        w1=u(ks[0], (h2, num_inputs), num_inputs),   b1=u(ks[1], (h2,), num_inputs),
        w2=u(ks[2], (hidden_size, h2), h2),          b2=u(ks[3], (hidden_size,), h2),
        wa1=u(ks[4], (h2, hidden_size), hidden_size), ba1=u(ks[5], (h2,), hidden_size),
        wa2=u(ks[6], (num_actions, h2), h2),         ba2=u(ks[7], (num_actions,), h2),
        wc1=u(ks[8], (h2, hidden_size), hidden_size), bc1=u(ks[9], (h2,), hidden_size),
        wc2=u(ks[10], (1, h2), h2),                  bc2=u(ks[11], (1,), h2),
        wr=u(ks[12], (h2, num_actions), num_actions), br=u(ks[13], (h2,), num_actions),
    )


def pack_params(raw, num_inputs, num_actions, hidden_size):
    """One-time layout work: transpose, lane-pad to 128 multiples, cast to bf16."""
    h = hidden_size
    h2 = h // 2
    h2_p = _round_up(h2, 128)
    h_p = _round_up(h, 128)
    # out_p >= num_actions + 1 so the value can always be packed into lane
    # `num_actions` of the (padded) policy output.
    out_p = _round_up(num_actions + 1, 128)
    # NOTE(v6e/v7x): if the real model grows, consider padding to 256 multiples
    # to fill the 256-wide MXU — only relevant once compute-bound.

    def padw(wT, rows_p, cols_p):               # wT: (in, out) f32 -> padded bf16
        out = jnp.zeros((rows_p, cols_p), jnp.float32)
        out = out.at[: wT.shape[0], : wT.shape[1]].set(wT)
        return out.astype(jnp.bfloat16)

    def padb(b, cols_p, fill=0.0):              # b: (out,) f32 -> (1, cols_p) f32
        out = jnp.full((1, cols_p), fill, jnp.float32)
        return out.at[0, : b.shape[0]].set(b)

    wc2_row = jnp.zeros((1, h2_p), jnp.float32).at[0, :h2].set(raw["wc2"][0])

    return dict(
        # w1 keeps K = num_inputs (no lane pad on the contraction dim).
        w1=padw(raw["w1"].T, num_inputs, h2_p), b1=padb(raw["b1"], h2_p),
        w2=padw(raw["w2"].T, h2_p, h_p),        b2=padb(raw["b2"], h_p),
        wac=jnp.concatenate([padw(raw["wa1"].T, h_p, h2_p),
                             padw(raw["wc1"].T, h_p, h2_p)], axis=1),
        bac=jnp.concatenate([padb(raw["ba1"], h2_p),
                             padb(raw["bc1"], h2_p)], axis=1),
        wa2=padw(raw["wa2"].T, h2_p, out_p),    ba2=padb(raw["ba2"], out_p, fill=-1e30),
        wr=padw(raw["wr"].T, out_p, h2_p),      br=padb(raw["br"], h2_p),
        wc2=wc2_row,                            bc2=padb(raw["bc2"], 128),
    )


# --------------------------------------------------------------------------
# Forward: one pallas_call, batch-tiled grid.
# --------------------------------------------------------------------------
@functools.partial(jax.jit, static_argnames=("num_actions",))
def forward(state, packed, *, num_actions):
    x = jnp.asarray(state, jnp.float32)
    if x.ndim == 1:
        x = x[None, :]
    batch, din = x.shape

    h2_p = packed["b1"].shape[1]
    out_p = packed["ba2"].shape[1]

    # Batch tiling: big tiles for throughput; for small batches split into >=2
    # grid steps (when possible) so v7x shards them over both TensorCores.
    b_pad_min = _round_up(batch, ROW_ALIGN)
    if b_pad_min >= 2 * TB_MAX:
        tb = TB_MAX
    else:
        tb = max(ROW_ALIGN, _round_up((b_pad_min + 1) // 2, ROW_ALIGN))
    b_pad = _round_up(b_pad_min, tb)

    # Only batch-pad the input; pre-cast to bf16 (no 128-lane host pad).
    x_bf = jnp.zeros((b_pad, din), jnp.bfloat16).at[:batch, :].set(
        x.astype(jnp.bfloat16))

    weights = (packed["w1"], packed["b1"], packed["w2"], packed["b2"],
               packed["wac"], packed["bac"], packed["wa2"], packed["ba2"],
               packed["wr"], packed["br"], packed["wc2"], packed["bc2"])

    def full_spec(arr):
        return pl.BlockSpec(tuple(arr.shape), lambda i: (0, 0))

    out = pl.pallas_call(
        functools.partial(_dsac_kernel, h2_p, num_actions),
        out_shape=jax.ShapeDtypeStruct((b_pad, out_p), jnp.float32),
        grid=(b_pad // tb,),
        in_specs=[pl.BlockSpec((tb, din), lambda i: (i, 0))]
                 + [full_spec(w) for w in weights],
        out_specs=pl.BlockSpec((tb, out_p), lambda i: (i, 0)),
        compiler_params=pltpu.CompilerParams(
            dimension_semantics=("parallel",)),
    )(x_bf, *weights)

    policy = out[:batch, :num_actions]
    value = out[:batch, num_actions:num_actions + 1]
    return value, policy


# --------------------------------------------------------------------------
# Pure-JAX f32 reference (mirrors the PyTorch module, batched per-row).
# --------------------------------------------------------------------------
def reference_forward(x, raw):
    leaky = lambda t: jnp.maximum(t, LEAKY_SLOPE * t)
    h1 = leaky(x @ raw["w1"].T + raw["b1"])
    h2 = leaky(h1 @ raw["w2"].T + raw["b2"])
    a1 = leaky(h2 @ raw["wa1"].T + raw["ba1"])
    policy = jax.nn.softmax(a1 @ raw["wa2"].T + raw["ba2"], axis=-1)
    c1 = leaky(h2 @ raw["wc1"].T + raw["bc1"])
    r = leaky(policy @ raw["wr"].T + raw["br"])
    value = jnp.maximum(c1 + r, 0.0) @ raw["wc2"].T + raw["bc2"]
    return value, policy


if __name__ == "__main__":
    NUM_INPUTS = 16
    NUM_ACTIONS = 4
    HIDDEN = 32
    BATCH = 8

    key = jax.random.PRNGKey(0)
    pkey, skey = jax.random.split(key)
    raw = init_params(pkey, NUM_INPUTS, NUM_ACTIONS, HIDDEN)
    packed = pack_params(raw, NUM_INPUTS, NUM_ACTIONS, HIDDEN)

    states = jax.random.normal(skey, (BATCH, NUM_INPUTS), jnp.float32)

    value, policy = forward(states, packed, num_actions=NUM_ACTIONS)
    jax.block_until_ready((value, policy))

    # original single-state interface still works (1-D state -> (1,1), (1,A))
    v1, p1 = forward(states[0], packed, num_actions=NUM_ACTIONS)
    jax.block_until_ready((v1, p1))
    assert v1.shape == (1, 1) and p1.shape == (1, NUM_ACTIONS)

    ref_value, ref_policy = reference_forward(states, raw)

    assert value.shape == (BATCH, 1)
    assert policy.shape == (BATCH, NUM_ACTIONS)
    policy_np = np.asarray(policy)
    value_np = np.asarray(value)
    assert np.all(np.isfinite(policy_np)) and np.all(np.isfinite(value_np))
    assert np.allclose(policy_np.sum(axis=1), 1.0, atol=1e-2)
    assert np.allclose(policy_np, np.asarray(ref_policy), atol=5e-2)
    assert np.allclose(value_np, np.asarray(ref_value), atol=7e-2, rtol=7e-2)
    print("KERNEL_OK")
</pallas_src>

<mosaic_0001>
module attributes {stable_mosaic.version = 11 : i64} {
  func.func @_dsac_kernel(%arg0: i32, %arg1: memref<16x16xbf16, #tpu.memory_space<vmem>>, %arg2: memref<16x128xbf16, #tpu.memory_space<vmem>>, %arg3: memref<1x128xf32, #tpu.memory_space<vmem>>, %arg4: memref<128x128xbf16, #tpu.memory_space<vmem>>, %arg5: memref<1x128xf32, #tpu.memory_space<vmem>>, %arg6: memref<128x256xbf16, #tpu.memory_space<vmem>>, %arg7: memref<1x256xf32, #tpu.memory_space<vmem>>, %arg8: memref<128x128xbf16, #tpu.memory_space<vmem>>, %arg9: memref<1x128xf32, #tpu.memory_space<vmem>>, %arg10: memref<128x128xbf16, #tpu.memory_space<vmem>>, %arg11: memref<1x128xf32, #tpu.memory_space<vmem>>, %arg12: memref<1x128xf32, #tpu.memory_space<vmem>>, %arg13: memref<1x128xf32, #tpu.memory_space<vmem>>, %arg14: memref<16x128xf32, #tpu.memory_space<vmem>>) attributes {dimension_semantics = [#tpu.dimension_semantics<parallel>], iteration_bounds = array<i64: 1>, scalar_prefetch = 0 : i64, scratch_operands = 0 : i64, tpu.core_type = #tpu.core_type<tc>, window_params = [{transform_indices = @transform_0, window_bounds = array<i64: 16, 16>}, {pipeline_mode = #tpu.pipeline_mode<synchronous>, transform_indices = @transform_1, window_bounds = array<i64: 16, 128>}, {pipeline_mode = #tpu.pipeline_mode<synchronous>, transform_indices = @transform_2, window_bounds = array<i64: 1, 128>}, {pipeline_mode = #tpu.pipeline_mode<synchronous>, transform_indices = @transform_3, window_bounds = array<i64: 128, 128>}, {pipeline_mode = #tpu.pipeline_mode<synchronous>, transform_indices = @transform_4, window_bounds = array<i64: 1, 128>}, {pipeline_mode = #tpu.pipeline_mode<synchronous>, transform_indices = @transform_5, window_bounds = array<i64: 128, 256>}, {pipeline_mode = #tpu.pipeline_mode<synchronous>, transform_indices = @transform_6, window_bounds = array<i64: 1, 256>}, {pipeline_mode = #tpu.pipeline_mode<synchronous>, transform_indices = @transform_7, window_bounds = array<i64: 128, 128>}, {pipeline_mode = #tpu.pipeline_mode<synchronous>, transform_indices = @transform_8, window_bounds = array<i64: 1, 128>}, {pipeline_mode = #tpu.pipeline_mode<synchronous>, transform_indices = @transform_9, window_bounds = array<i64: 128, 128>}, {pipeline_mode = #tpu.pipeline_mode<synchronous>, transform_indices = @transform_10, window_bounds = array<i64: 1, 128>}, {pipeline_mode = #tpu.pipeline_mode<synchronous>, transform_indices = @transform_11, window_bounds = array<i64: 1, 128>}, {pipeline_mode = #tpu.pipeline_mode<synchronous>, transform_indices = @transform_12, window_bounds = array<i64: 1, 128>}, {transform_indices = @transform_13, window_bounds = array<i64: 16, 128>}]} {
    %c0 = arith.constant 0 : index
    %c0_0 = arith.constant 0 : index
    %0 = vector.load %arg1[%c0, %c0_0] : memref<16x16xbf16, #tpu.memory_space<vmem>>, vector<16x16xbf16>
    %c0_1 = arith.constant 0 : index
    %c0_2 = arith.constant 0 : index
    %1 = vector.load %arg2[%c0_1, %c0_2] : memref<16x128xbf16, #tpu.memory_space<vmem>>, vector<16x128xbf16>
    %cst = arith.constant dense<0.000000e+00> : vector<16x128xf32>
    %2 = tpu.matmul %0, %1, %cst {dimension_numbers = #tpu.dot_dimension_numbers<[1], [0], [0], [1], [0, 0, 1, 1], [], []>} : vector<16x16xbf16>, vector<16x128xbf16>, vector<16x128xf32> -> vector<16x128xf32>
    %c0_3 = arith.constant 0 : index
    %c0_4 = arith.constant 0 : index
    %3 = vector.load %arg3[%c0_3, %c0_4] : memref<1x128xf32, #tpu.memory_space<vmem>>, vector<1x128xf32>
    %4 = vector.broadcast %3 : vector<1x128xf32> to vector<16x128xf32>
    %5 = arith.addf %2, %4 : vector<16x128xf32>
    %cst_5 = arith.constant 0.00999999977 : f32
    %6 = vector.broadcast %cst_5 : f32 to vector<16x128xf32>
    %7 = arith.mulf %6, %5 : vector<16x128xf32>
    %8 = arith.maximumf %5, %7 : vector<16x128xf32>
    %9 = arith.truncf %8 : vector<16x128xf32> to vector<16x128xbf16>
    %c0_6 = arith.constant 0 : index
    %c0_7 = arith.constant 0 : index
    %10 = vector.load %arg4[%c0_6, %c0_7] : memref<128x128xbf16, #tpu.memory_space<vmem>>, vector<128x128xbf16>
    %cst_8 = arith.constant dense<0.000000e+00> : vector<16x128xf32>
    %11 = tpu.matmul %9, %10, %cst_8 {dimension_numbers = #tpu.dot_dimension_numbers<[1], [0], [0], [1], [0, 0, 1, 1], [], []>} : vector<16x128xbf16>, vector<128x128xbf16>, vector<16x128xf32> -> vector<16x128xf32>
    %c0_9 = arith.constant 0 : index
    %c0_10 = arith.constant 0 : index
    %12 = vector.load %arg5[%c0_9, %c0_10] : memref<1x128xf32, #tpu.memory_space<vmem>>, vector<1x128xf32>
    %13 = vector.broadcast %12 : vector<1x128xf32> to vector<16x128xf32>
    %14 = arith.addf %11, %13 : vector<16x128xf32>
    %cst_11 = arith.constant 0.00999999977 : f32
    %15 = vector.broadcast %cst_11 : f32 to vector<16x128xf32>
    %16 = arith.mulf %15, %14 : vector<16x128xf32>
    %17 = arith.maximumf %14, %16 : vector<16x128xf32>
    %18 = arith.truncf %17 : vector<16x128xf32> to vector<16x128xbf16>
    %c0_12 = arith.constant 0 : index
    %c0_13 = arith.constant 0 : index
    %19 = vector.load %arg6[%c0_12, %c0_13] : memref<128x256xbf16, #tpu.memory_space<vmem>>, vector<128x256xbf16>
    %cst_14 = arith.constant dense<0.000000e+00> : vector<16x256xf32>
    %20 = tpu.matmul %18, %19, %cst_14 {dimension_numbers = #tpu.dot_dimension_numbers<[1], [0], [0], [1], [0, 0, 1, 1], [], []>} : vector<16x128xbf16>, vector<128x256xbf16>, vector<16x256xf32> -> vector<16x256xf32>
    %c0_15 = arith.constant 0 : index
    %c0_16 = arith.constant 0 : index
    %21 = vector.load %arg7[%c0_15, %c0_16] : memref<1x256xf32, #tpu.memory_space<vmem>>, vector<1x256xf32>
    %22 = vector.broadcast %21 : vector<1x256xf32> to vector<16x256xf32>
    %23 = arith.addf %20, %22 : vector<16x256xf32>
    %cst_17 = arith.constant 0.00999999977 : f32
    %24 = vector.broadcast %cst_17 : f32 to vector<16x256xf32>
    %25 = arith.mulf %24, %23 : vector<16x256xf32>
    %26 = arith.maximumf %23, %25 : vector<16x256xf32>
    %27 = vector.extract_strided_slice %26 {offsets = [0, 0], sizes = [16, 128], strides = [1, 1]} : vector<16x256xf32> to vector<16x128xf32>
    %28 = arith.truncf %27 : vector<16x128xf32> to vector<16x128xbf16>
    %29 = vector.extract_strided_slice %26 {offsets = [0, 128], sizes = [16, 128], strides = [1, 1]} : vector<16x256xf32> to vector<16x128xf32>
    %c0_18 = arith.constant 0 : index
    %c0_19 = arith.constant 0 : index
    %30 = vector.load %arg8[%c0_18, %c0_19] : memref<128x128xbf16, #tpu.memory_space<vmem>>, vector<128x128xbf16>
    %cst_20 = arith.constant dense<0.000000e+00> : vector<16x128xf32>
    %31 = tpu.matmul %28, %30, %cst_20 {dimension_numbers = #tpu.dot_dimension_numbers<[1], [0], [0], [1], [0, 0, 1, 1], [], []>} : vector<16x128xbf16>, vector<128x128xbf16>, vector<16x128xf32> -> vector<16x128xf32>
    %c0_21 = arith.constant 0 : index
    %c0_22 = arith.constant 0 : index
    %32 = vector.load %arg9[%c0_21, %c0_22] : memref<1x128xf32, #tpu.memory_space<vmem>>, vector<1x128xf32>
    %33 = vector.broadcast %32 : vector<1x128xf32> to vector<16x128xf32>
    %34 = arith.addf %31, %33 : vector<16x128xf32>
    %cst_23 = arith.constant dense<0xFF800000> : vector<16xf32>
    %35 = vector.multi_reduction <maximumf>, %34, %cst_23 [1] : vector<16x128xf32> to vector<16xf32>
    %36 = vector.shape_cast %35 : vector<16xf32> to vector<16x1xf32>
    %37 = vector.broadcast %36 : vector<16x1xf32> to vector<16x128xf32>
    %38 = arith.subf %34, %37 : vector<16x128xf32>
    %39 = math.exp %38 : vector<16x128xf32>
    %cst_24 = arith.constant dense<0.000000e+00> : vector<16xf32>
    %40 = vector.multi_reduction <add>, %39, %cst_24 [1] : vector<16x128xf32> to vector<16xf32>
    %41 = vector.shape_cast %40 : vector<16xf32> to vector<16x1xf32>
    %42 = tpu.reciprocal %41 {approx = true} : vector<16x1xf32> -> vector<16x1xf32>
    %43 = vector.broadcast %42 : vector<16x1xf32> to vector<16x128xf32>
    %44 = arith.mulf %39, %43 : vector<16x128xf32>
    %45 = arith.truncf %44 : vector<16x128xf32> to vector<16x128xbf16>
    %c0_25 = arith.constant 0 : index
    %c0_26 = arith.constant 0 : index
    %46 = vector.load %arg10[%c0_25, %c0_26] : memref<128x128xbf16, #tpu.memory_space<vmem>>, vector<128x128xbf16>
    %cst_27 = arith.constant dense<0.000000e+00> : vector<16x128xf32>
    %47 = tpu.matmul %45, %46, %cst_27 {dimension_numbers = #tpu.dot_dimension_numbers<[1], [0], [0], [1], [0, 0, 1, 1], [], []>} : vector<16x128xbf16>, vector<128x128xbf16>, vector<16x128xf32> -> vector<16x128xf32>
    %c0_28 = arith.constant 0 : index
    %c0_29 = arith.constant 0 : index
    %48 = vector.load %arg11[%c0_28, %c0_29] : memref<1x128xf32, #tpu.memory_space<vmem>>, vector<1x128xf32>
    %49 = vector.broadcast %48 : vector<1x128xf32> to vector<16x128xf32>
    %50 = arith.addf %47, %49 : vector<16x128xf32>
    %cst_30 = arith.constant 0.00999999977 : f32
    %51 = vector.broadcast %cst_30 : f32 to vector<16x128xf32>
    %52 = arith.mulf %51, %50 : vector<16x128xf32>
    %53 = arith.maximumf %50, %52 : vector<16x128xf32>
    %54 = arith.addf %29, %53 : vector<16x128xf32>
    %cst_31 = arith.constant 0.000000e+00 : f32
    %55 = vector.broadcast %cst_31 : f32 to vector<16x128xf32>
    %56 = arith.maximumf %54, %55 : vector<16x128xf32>
    %c0_32 = arith.constant 0 : index
    %c0_33 = arith.constant 0 : index
    %57 = vector.load %arg12[%c0_32, %c0_33] : memref<1x128xf32, #tpu.memory_space<vmem>>, vector<1x128xf32>
    %58 = vector.broadcast %57 : vector<1x128xf32> to vector<16x128xf32>
    %59 = arith.mulf %56, %58 : vector<16x128xf32>
    %cst_34 = arith.constant dense<0.000000e+00> : vector<16xf32>
    %60 = vector.multi_reduction <add>, %59, %cst_34 [1] : vector<16x128xf32> to vector<16xf32>
    %61 = vector.shape_cast %60 : vector<16xf32> to vector<16x1xf32>
    %c0_35 = arith.constant 0 : index
    %c0_36 = arith.constant 0 : index
    %62 = vector.load %arg13[%c0_35, %c0_36] : memref<1x128xf32, #tpu.memory_space<vmem>>, vector<1x128xf32>
    %63 = vector.extract_strided_slice %62 {offsets = [0, 0], sizes = [1, 1], strides = [1, 1]} : vector<1x128xf32> to vector<1x1xf32>
    %64 = vector.broadcast %63 : vector<1x1xf32> to vector<16x1xf32>
    %65 = arith.addf %61, %64 : vector<16x1xf32>
    %66 = tpu.iota {dimensions = array<i32: 1>} : vector<16x128xi32>
    %c4_i32 = arith.constant 4 : i32
    %67 = vector.broadcast %c4_i32 : i32 to vector<16x128xi32>
    %68 = arith.cmpi eq, %66, %67 : vector<16x128xi32>
    %69 = vector.shape_cast %65 : vector<16x1xf32> to vector<16x1xf32>
    %70 = vector.broadcast %69 : vector<16x1xf32> to vector<16x128xf32>
    %71 = arith.select %68, %70, %44 : vector<16x128xi1>, vector<16x128xf32>
    %c0_37 = arith.constant 0 : index
    %c0_38 = arith.constant 0 : index
    %72 = vector.load %arg14[%c0_37, %c0_38] : memref<16x128xf32, #tpu.memory_space<vmem>>, vector<16x128xf32>
    tpu.vector_store %arg14[%c0_37, %c0_38], %71 {strides = array<i32>} : memref<16x128xf32, #tpu.memory_space<vmem>>, vector<16x128xf32>,
    return
  }
  func.func @transform_0(%arg0: i32) -> (i32, i32) {
    %c0_i32 = arith.constant 0 : i32
    %c0_i32_0 = arith.constant 0 : i32
    return %arg0, %c0_i32 : i32, i32
  }
  func.func @transform_1(%arg0: i32) -> (i32, i32) {
    %c0_i32 = arith.constant 0 : i32
    %c0_i32_0 = arith.constant 0 : i32
    %c0_i32_1 = arith.constant 0 : i32
    return %c0_i32, %c0_i32_0 : i32, i32
  }
  func.func @transform_2(%arg0: i32) -> (i32, i32) {
    %c0_i32 = arith.constant 0 : i32
    %c0_i32_0 = arith.constant 0 : i32
    %c0_i32_1 = arith.constant 0 : i32
    return %c0_i32, %c0_i32_0 : i32, i32
  }
  func.func @transform_3(%arg0: i32) -> (i32, i32) {
    %c0_i32 = arith.constant 0 : i32
    %c0_i32_0 = arith.constant 0 : i32
    %c0_i32_1 = arith.constant 0 : i32
    return %c0_i32, %c0_i32_0 : i32, i32
  }
  func.func @transform_4(%arg0: i32) -> (i32, i32) {
    %c0_i32 = arith.constant 0 : i32
    %c0_i32_0 = arith.constant 0 : i32
    %c0_i32_1 = arith.constant 0 : i32
    return %c0_i32, %c0_i32_0 : i32, i32
  }
  func.func @transform_5(%arg0: i32) -> (i32, i32) {
    %c0_i32 = arith.constant 0 : i32
    %c0_i32_0 = arith.constant 0 : i32
    %c0_i32_1 = arith.constant 0 : i32
    return %c0_i32, %c0_i32_0 : i32, i32
  }
  func.func @transform_6(%arg0: i32) -> (i32, i32) {
    %c0_i32 = arith.constant 0 : i32
    %c0_i32_0 = arith.constant 0 : i32
    %c0_i32_1 = arith.constant 0 : i32
    return %c0_i32, %c0_i32_0 : i32, i32
  }
  func.func @transform_7(%arg0: i32) -> (i32, i32) {
    %c0_i32 = arith.constant 0 : i32
    %c0_i32_0 = arith.constant 0 : i32
    %c0_i32_1 = arith.constant 0 : i32
    return %c0_i32, %c0_i32_0 : i32, i32
  }
  func.func @transform_8(%arg0: i32) -> (i32, i32) {
    %c0_i32 = arith.constant 0 : i32
    %c0_i32_0 = arith.constant 0 : i32
    %c0_i32_1 = arith.constant 0 : i32
    return %c0_i32, %c0_i32_0 : i32, i32
  }
  func.func @transform_9(%arg0: i32) -> (i32, i32) {
    %c0_i32 = arith.constant 0 : i32
    %c0_i32_0 = arith.constant 0 : i32
    %c0_i32_1 = arith.constant 0 : i32
    return %c0_i32, %c0_i32_0 : i32, i32
  }
  func.func @transform_10(%arg0: i32) -> (i32, i32) {
    %c0_i32 = arith.constant 0 : i32
    %c0_i32_0 = arith.constant 0 : i32
    %c0_i32_1 = arith.constant 0 : i32
    return %c0_i32, %c0_i32_0 : i32, i32
  }
  func.func @transform_11(%arg0: i32) -> (i32, i32) {
    %c0_i32 = arith.constant 0 : i32
    %c0_i32_0 = arith.constant 0 : i32
    %c0_i32_1 = arith.constant 0 : i32
    return %c0_i32, %c0_i32_0 : i32, i32
  }
  func.func @transform_12(%arg0: i32) -> (i32, i32) {
    %c0_i32 = arith.constant 0 : i32
    %c0_i32_0 = arith.constant 0 : i32
    %c0_i32_1 = arith.constant 0 : i32
    return %c0_i32, %c0_i32_0 : i32, i32
  }
  func.func @transform_13(%arg0: i32) -> (i32, i32) {
    %c0_i32 = arith.constant 0 : i32
    %c0_i32_0 = arith.constant 0 : i32
    return %arg0, %c0_i32 : i32, i32
  }
}

</mosaic_0001>

<llo_original>
// kernel: forward.1
$region0: #{forward.1}
  #allocation0 [shape = 'u32[]', space=smem, size = 0x4, offset = 0x4, fixed_abs, tag = 'smem constant byte address 0x4 - core index']
  #allocation1 [shape = 'u32[144,128]{1,0:T(1,128)}', space=vmem, size = 0x12000, scoped, tag = 'internal scratch']
  %s0 = inlined_call_operand.vmem [shape: bf16[16,16], index: 0, kind: input, shape index: {}]
  %s1 = inlined_call_operand.vmem [shape: bf16[16,128], index: 1, kind: input, shape index: {}]
  %s2 = inlined_call_operand.vmem [shape: f32[1,128], index: 2, kind: input, shape index: {}]
  %s3 = inlined_call_operand.hbm [shape: bf16[128,128], index: 3, kind: input, shape index: {}]
  %s4 = inlined_call_operand.vmem [shape: f32[1,128], index: 4, kind: input, shape index: {}]
  %s5 = inlined_call_operand.hbm [shape: bf16[128,256], index: 5, kind: input, shape index: {}]
  %s6 = inlined_call_operand.vmem [shape: f32[1,256], index: 6, kind: input, shape index: {}]
  %s7 = inlined_call_operand.hbm [shape: bf16[128,128], index: 7, kind: input, shape index: {}]
  %s8 = inlined_call_operand.vmem [shape: f32[1,128], index: 8, kind: input, shape index: {}]
  %s9 = inlined_call_operand.hbm [shape: bf16[128,128], index: 9, kind: input, shape index: {}]
  %s10 = inlined_call_operand.vmem [shape: f32[1,128], index: 10, kind: input, shape index: {}]
  %s11 = inlined_call_operand.vmem [shape: f32[1,128], index: 11, kind: input, shape index: {}]
  %s12 = inlined_call_operand.vmem [shape: f32[1,128], index: 12, kind: input, shape index: {}]
  %s13 = inlined_call_operand.vmem [shape: f32[16,128], index: 13, kind: output, shape index: {}]
  %s14 = sld [smem:[#allocation0]]
  $region78: #{forward.1} parent=0
    _
  %s16 = ssub.s32 1, %s14
  %s17 = scalar_select 0, %s16, %s14
  $region1: #{forward.1} parent=0
    #allocation2 [shape = 'u8[32768]{0}', space=vmem, size = 0x8000, scoped, tag = 'input window, operand 3, single buffered']
    #allocation3 [shape = 's32[1]{0}', space=sflag, size = 0x4, scoped, tag = 'scoped memory for forward.1']
    #allocation4 [shape = 'u8[65536]{0}', space=vmem, size = 0x10000, scoped, tag = 'input window, operand 5, single buffered']
    #allocation5 [shape = 's32[1]{0}', space=sflag, size = 0x4, scoped, tag = 'scoped memory for forward.1']
    #allocation6 [shape = 'u8[32768]{0}', space=vmem, size = 0x8000, scoped, tag = 'input window, operand 7, single buffered']
    #allocation7 [shape = 'u8[32768]{0}', space=vmem, size = 0x8000, scoped, tag = 'input window, operand 9, single buffered']
    #allocation8 [shape = 's32[1]{0}', space=sflag, size = 0x4, scoped, tag = 'scoped memory for forward.1']
    %18 = vsyncpa [#allocation3], 0
    %19 = vsyncpa [#allocation5], 0
    %20 = vsyncpa [#allocation8], 0
    // Predicated region
    $region2: #{forward.1} parent=1 // pred_check
      _
    $region3: #{forward.1} parent=1 // pred_check_branch
      %22 = sbr.rel (0) target = $region5
    $region4: #{forward.1} parent=1 // pred_region
      _
    $region5: #{forward.1} parent=1 // pred_fallthru
      _
    // Predicated region
    $region6: #{forward.1} parent=1 // pred_check
      _
    $region7: #{forward.1} parent=1 // pred_check_branch
      %24 = sbr.rel (0) target = $region9
    $region8: #{forward.1} parent=1 // pred_region
      _
    $region9: #{forward.1} parent=1 // pred_fallthru
      _
    // Predicated region
    $region10: #{forward.1} parent=1 // pred_check
      _
    $region11: #{forward.1} parent=1 // pred_check_branch
      %26 = sbr.rel (0) target = $region13
    $region12: #{forward.1} parent=1 // pred_region
      _
    $region13: #{forward.1} parent=1 // pred_fallthru
      _
    // Predicated region
    $region14: #{forward.1} parent=1 // pred_check
      _
    $region15: #{forward.1} parent=1 // pred_check_branch
      %28 = sbr.rel (0) target = $region17
    $region16: #{forward.1} parent=1 // pred_region
      %s30 = ssub.s32 1024, 1024
      %31 = vsyncadd [#allocation3], %s30
      %s32 = sshll.u32 [#allocation2], 4
      %s33 = int_to_ptr.vmem [resolvable:$true] %s32
      %38 = dma.hbm_to_vmem [thread:$0]  %s3, 1024, %s33, [#allocation3], 64, 64, 4
    $region17: #{forward.1} parent=1 // pred_fallthru
      _
    // Predicated region
    $region18: #{forward.1} parent=1 // pred_check
      _
    $region19: #{forward.1} parent=1 // pred_check_branch
      %40 = sbr.rel (0) target = $region21
    $region20: #{forward.1} parent=1 // pred_region
      _
    $region21: #{forward.1} parent=1 // pred_fallthru
      _
    // Predicated region
    $region22: #{forward.1} parent=1 // pred_check
      _
    $region23: #{forward.1} parent=1 // pred_check_branch
      %42 = sbr.rel (0) target = $region25
    $region24: #{forward.1} parent=1 // pred_region
      %s44 = ssub.s32 2048, 2048
      %45 = vsyncadd [#allocation5], %s44
      %s46 = sshll.u32 [#allocation4], 4
      %s47 = int_to_ptr.vmem [resolvable:$true] %s46
      %52 = dma.hbm_to_vmem [thread:$0]  %s5, 2048, %s47, [#allocation5], 128, 128, 8
    $region25: #{forward.1} parent=1 // pred_fallthru
      _
    // Predicated region
    $region26: #{forward.1} parent=1 // pred_check
      _
    $region27: #{forward.1} parent=1 // pred_check_branch
      %54 = sbr.rel (0) target = $region29
    $region28: #{forward.1} parent=1 // pred_region
      _
    $region29: #{forward.1} parent=1 // pred_fallthru
      _
    // Predicated region
    $region30: #{forward.1} parent=1 // pred_check
      _
    $region31: #{forward.1} parent=1 // pred_check_branch
      %56 = sbr.rel (0) target = $region33
    $region32: #{forward.1} parent=1 // pred_region
      %s58 = ssub.s32 1024, 1024
      %59 = vsyncadd [#allocation5], %s58
      %s60 = sshll.u32 [#allocation6], 4
      %s61 = int_to_ptr.vmem [resolvable:$true] %s60
      %66 = dma.hbm_to_vmem [thread:$0]  %s7, 1024, %s61, [#allocation5], 64, 64, 4
    $region33: #{forward.1} parent=1 // pred_fallthru
      _
    // Predicated region
    $region34: #{forward.1} parent=1 // pred_check
      _
    $region35: #{forward.1} parent=1 // pred_check_branch
      %68 = sbr.rel (0) target = $region37
    $region36: #{forward.1} parent=1 // pred_region
      _
    $region37: #{forward.1} parent=1 // pred_fallthru
      _
    // Predicated region
    $region38: #{forward.1} parent=1 // pred_check
      _
    $region39: #{forward.1} parent=1 // pred_check_branch
      %70 = sbr.rel (0) target = $region41
    $region40: #{forward.1} parent=1 // pred_region
      %s72 = ssub.s32 1024, 1024
      %73 = vsyncadd [#allocation8], %s72
      %s74 = sshll.u32 [#allocation7], 4
      %s75 = int_to_ptr.vmem [resolvable:$true] %s74
      %80 = dma.hbm_to_vmem [thread:$0]  %s9, 1024, %s75, [#allocation8], 64, 64, 4
    $region41: #{forward.1} parent=1 // pred_fallthru
      _
    // Predicated region
    $region42: #{forward.1} parent=1 // pred_check
      _
    $region43: #{forward.1} parent=1 // pred_check_branch
      %82 = sbr.rel (0) target = $region45
    $region44: #{forward.1} parent=1 // pred_region
      _
    $region45: #{forward.1} parent=1 // pred_fallthru
      _
    // Predicated region
    $region46: #{forward.1} parent=1 // pred_check
      _
    $region47: #{forward.1} parent=1 // pred_check_branch
      %84 = sbr.rel (0) target = $region49
    $region48: #{forward.1} parent=1 // pred_region
      _
    $region49: #{forward.1} parent=1 // pred_fallthru
      _
    // Predicated region
    $region50: #{forward.1} parent=1 // pred_check
      _
    $region51: #{forward.1} parent=1 // pred_check_branch
      %86 = sbr.rel (0) target = $region53
    $region52: #{forward.1} parent=1 // pred_region
      _
    $region53: #{forward.1} parent=1 // pred_fallthru
      _
    // Predicated region
    $region54: #{forward.1} parent=1 // pred_check
      _
    $region55: #{forward.1} parent=1 // pred_check_branch
      %88 = sbr.rel (0) target = $region57
    $region56: #{forward.1} parent=1 // pred_region
      %89 = dma.done [#allocation3], 1024
    $region57: #{forward.1} parent=1 // pred_fallthru
      _
    // Predicated region
    $region58: #{forward.1} parent=1 // pred_check
      _
    $region59: #{forward.1} parent=1 // pred_check_branch
      %91 = sbr.rel (0) target = $region61
    $region60: #{forward.1} parent=1 // pred_region
      %92 = dma.done [#allocation5], 2048
    $region61: #{forward.1} parent=1 // pred_fallthru
      _
    // Predicated region
    $region62: #{forward.1} parent=1 // pred_check
      _
    $region63: #{forward.1} parent=1 // pred_check_branch
      %94 = sbr.rel (0) target = $region65
    $region64: #{forward.1} parent=1 // pred_region
      %95 = dma.done [#allocation5], 1024
    $region65: #{forward.1} parent=1 // pred_fallthru
      _
    // Predicated region
    $region66: #{forward.1} parent=1 // pred_check
      _
    $region67: #{forward.1} parent=1 // pred_check_branch
      %97 = sbr.rel (0) target = $region69
    $region68: #{forward.1} parent=1 // pred_region
      %98 = dma.done [#allocation8], 1024
    $region69: #{forward.1} parent=1 // pred_fallthru
      _
    %v100 = vld [vmem:[%s0] sm:$0xf]
    %v101 = vld [vmem:[%s0 + $0x4] sm:$0xf]
    %v102 = vld [vmem:[%s1] sm:$0xf]
    %v103 = vld [vmem:[%s1 + $0x4] sm:$0xf]
    %v104 = vld [vmem:[%s2] sm:$0x1]
    %v106 = vlaneseq
    %v107 = vshrl.u32 %v106, 7
    %v108 = vsub.s32 0, %v107
    %v109 = vrot.slane %v104, %v108
    %v113 = vunpack.c.l.b16 %v100
    %v114 = vunpack.c.l.b16 %v101
    %v115 = vpack.c.b16 %v114, %v113
    %v118 = vunpack.c.l.b16 %v102
    %v119 = vunpack.c.l.b16 %v103
    %v120 = vpack.c.b16 %v119, %v118
    %vm122 = vcmask 130048
    %v124 = vsel %vm122, %v115, 0
    %126 = vmatprep.subr.bf16.mxu0 0
    %127 = vmatpush1.bf16.msra.mxu0 %v120
    %128 = vmatprep.subr.bf16.mxu0 0
    %129 = vmatpush1.bf16.msra.mxu0 0
    %130 = vmatprep.subr.bf16.mxu0 0
    %131 = vmatpush1.bf16.msra.mxu0 0
    %132 = vmatprep.subr.bf16.mxu0 0
    %133 = vmatpush1.bf16.msra.mxu0 0
    %134 = vmatprep.subr.bf16.mxu0 0
    %135 = vmatpush1.bf16.msra.mxu0 0
    %136 = vmatprep.subr.bf16.mxu0 0
    %137 = vmatpush1.bf16.msra.mxu0 0
    %138 = vmatprep.subr.bf16.mxu0 0
    %139 = vmatpush1.bf16.msra.mxu0 0
    %140 = vmatprep.subr.bf16.mxu0 0
    %141 = vmatpush1.bf16.msra.mxu0 0
    %142 = vmatprep.subr.bf16.mxu0 0
    %143 = vmatpush1.bf16.msra.mxu0 0
    %144 = vmatprep.subr.bf16.mxu0 0
    %145 = vmatpush1.bf16.msra.mxu0 0
    %146 = vmatprep.subr.bf16.mxu0 0
    %147 = vmatpush1.bf16.msra.mxu0 0
    %148 = vmatprep.subr.bf16.mxu0 0
    %149 = vmatpush1.bf16.msra.mxu0 0
    %150 = vmatprep.subr.bf16.mxu0 0
    %151 = vmatpush1.bf16.msra.mxu0 0
    %152 = vmatprep.subr.bf16.mxu0 0
    %153 = vmatpush1.bf16.msra.mxu0 0
    %154 = vmatprep.subr.bf16.mxu0 0
    %155 = vmatpush1.bf16.msra.mxu0 0
    %156 = vmatprep.subr.bf16.mxu0 0
    %157 = vmatpush1.bf16.msra.mxu0 0
    %158 = vmatprep.mubr.bf16.mxu0 0
    %159 = vmatmul.mubr.bf16.gmra.mrb[0].mxu0 %v124
    %v160 = vpop.f32.mrb[0].mxu0
    %v161 = vadd.f32 %v109, %v160
    %v162 = vpop.f32.mrb[0].mxu0
    %v163 = vpop.f32.mrb[0].mxu0
    %v164 = vadd.f32 %v109, %v163
    %v165 = vpop.f32.mrb[0].mxu0
    %166 = vdwg.mxu0
    %v167 = vmul.f32 %v161, 0.01
    %v168 = vmul.f32 %v164, 0.01
    %v169 = vmax.f32 %v161, %v167
    %v170 = vmax.f32 %v164, %v168
    %v171 = vpack.c.bf16 %v170, %v169
    %v172 = vld [vmem:[#allocation2] sm:$0xf]
    %v173 = vld [vmem:[#allocation2 + $0x4] sm:$0xf]
    %v174 = vld [vmem:[#allocation2 + $0x8] sm:$0xf]
    %v175 = vld [vmem:[#allocation2 + $0xc] sm:$0xf]
    %v176 = vld [vmem:[#allocation2 + $0x10] sm:$0xf]
    %v177 = vld [vmem:[#allocation2 + $0x14] sm:$0xf]
    %v178 = vld [vmem:[#allocation2 + $0x18] sm:$0xf]
    %v179 = vld [vmem:[#allocation2 + $0x1c] sm:$0xf]
    %v180 = vld [vmem:[#allocation2 + $0x20] sm:$0xf]
    %v181 = vld [vmem:[#allocation2 + $0x24] sm:$0xf]
    %v182 = vld [vmem:[#allocation2 + $0x28] sm:$0xf]
    %v183 = vld [vmem:[#allocation2 + $0x2c] sm:$0xf]
    %v184 = vld [vmem:[#allocation2 + $0x30] sm:$0xf]
    %v185 = vld [vmem:[#allocation2 + $0x34] sm:$0xf]
    %v186 = vld [vmem:[#allocation2 + $0x38] sm:$0xf]
    %v187 = vld [vmem:[#allocation2 + $0x3c] sm:$0xf]
    %v188 = vld [vmem:[%s4] sm:$0x1]
    %v190 = vlaneseq
    %v191 = vshrl.u32 %v190, 7
    %v192 = vsub.s32 0, %v191
    %v193 = vrot.slane %v188, %v192
    %v211 = vunpack.c.l.b16 %v172
    %v212 = vunpack.c.l.b16 %v173
    %v213 = vunpack.c.l.b16 %v174
    %v214 = vunpack.c.l.b16 %v175
    %v215 = vunpack.c.l.b16 %v176
    %v216 = vunpack.c.l.b16 %v177
    %v217 = vunpack.c.l.b16 %v178
    %v218 = vunpack.c.l.b16 %v179
    %v219 = vunpack.c.l.b16 %v180
    %v220 = vunpack.c.l.b16 %v181
    %v221 = vunpack.c.l.b16 %v182
    %v222 = vunpack.c.l.b16 %v183
    %v223 = vunpack.c.l.b16 %v184
    %v224 = vunpack.c.l.b16 %v185
    %v225 = vunpack.c.l.b16 %v186
    %v226 = vunpack.c.l.b16 %v187
    %v227 = vpack.c.b16 %v212, %v211
    %v228 = vpack.c.b16 %v214, %v213
    %v229 = vpack.c.b16 %v216, %v215
    %v230 = vpack.c.b16 %v218, %v217
    %v231 = vpack.c.b16 %v220, %v219
    %v232 = vpack.c.b16 %v222, %v221
    %v233 = vpack.c.b16 %v224, %v223
    %v234 = vpack.c.b16 %v226, %v225
    %243 = vmatprep.subr.bf16.mxu0 0
    %244 = vmatpush1.bf16.msra.mxu0 %v227
    %245 = vmatprep.subr.bf16.mxu0 0
    %246 = vmatpush1.bf16.msra.mxu0 %v228
    %247 = vmatprep.subr.bf16.mxu0 0
    %248 = vmatpush1.bf16.msra.mxu0 %v229
    %249 = vmatprep.subr.bf16.mxu0 0
    %250 = vmatpush1.bf16.msra.mxu0 %v230
    %251 = vmatprep.subr.bf16.mxu0 0
    %252 = vmatpush1.bf16.msra.mxu0 %v231
    %253 = vmatprep.subr.bf16.mxu0 0
    %254 = vmatpush1.bf16.msra.mxu0 %v232
    %255 = vmatprep.subr.bf16.mxu0 0
    %256 = vmatpush1.bf16.msra.mxu0 %v233
    %257 = vmatprep.subr.bf16.mxu0 0
    %258 = vmatpush1.bf16.msra.mxu0 %v234
    %259 = vmatprep.subr.bf16.mxu0 0
    %260 = vmatpush1.bf16.msra.mxu0 0
    %261 = vmatprep.subr.bf16.mxu0 0
    %262 = vmatpush1.bf16.msra.mxu0 0
    %263 = vmatprep.subr.bf16.mxu0 0
    %264 = vmatpush1.bf16.msra.mxu0 0
    %265 = vmatprep.subr.bf16.mxu0 0
    %266 = vmatpush1.bf16.msra.mxu0 0
    %267 = vmatprep.subr.bf16.mxu0 0
    %268 = vmatpush1.bf16.msra.mxu0 0
    %269 = vmatprep.subr.bf16.mxu0 0
    %270 = vmatpush1.bf16.msra.mxu0 0
    %271 = vmatprep.subr.bf16.mxu0 0
    %272 = vmatpush1.bf16.msra.mxu0 0
    %273 = vmatprep.subr.bf16.mxu0 0
    %274 = vmatpush1.bf16.msra.mxu0 0
    %275 = vmatprep.mubr.bf16.mxu0 0
    %276 = vmatmul.mubr.bf16.gmra.mrb[0].mxu0 %v171
    %v277 = vpop.f32.mrb[0].mxu0
    %v278 = vadd.f32 %v193, %v277
    %v279 = vpop.f32.mrb[0].mxu0
    %v280 = vpop.f32.mrb[0].mxu0
    %v281 = vadd.f32 %v193, %v280
    %v282 = vpop.f32.mrb[0].mxu0
    %283 = vdwg.mxu0
    %v284 = vmul.f32 %v278, 0.01
    %v285 = vmul.f32 %v281, 0.01
    %v286 = vmax.f32 %v278, %v284
    %v287 = vmax.f32 %v281, %v285
    %v288 = vpack.c.bf16 %v287, %v286
    %v289 = vld [vmem:[#allocation4] sm:$0xff]
    %v290 = vld [vmem:[#allocation4 + $0x8] sm:$0xff]
    %v291 = vld [vmem:[#allocation4 + $0x10] sm:$0xff]
    %v292 = vld [vmem:[#allocation4 + $0x18] sm:$0xff]
    %v293 = vld [vmem:[#allocation4 + $0x20] sm:$0xff]
    %v294 = vld [vmem:[#allocation4 + $0x28] sm:$0xff]
    %v295 = vld [vmem:[#allocation4 + $0x30] sm:$0xff]
    %v296 = vld [vmem:[#allocation4 + $0x38] sm:$0xff]
    %v297 = vld [vmem:[#allocation4 + $0x40] sm:$0xff]
    %v298 = vld [vmem:[#allocation4 + $0x48] sm:$0xff]
    %v299 = vld [vmem:[#allocation4 + $0x50] sm:$0xff]
    %v300 = vld [vmem:[#allocation4 + $0x58] sm:$0xff]
    %v301 = vld [vmem:[#allocation4 + $0x60] sm:$0xff]
    %v302 = vld [vmem:[#allocation4 + $0x68] sm:$0xff]
    %v303 = vld [vmem:[#allocation4 + $0x70] sm:$0xff]
    %v304 = vld [vmem:[#allocation4 + $0x78] sm:$0xff]
    %v305 = vld [vmem:[%s6] sm:$0x3]
    %v307 = vlaneseq
    %v308 = vshrl.u32 %v307, 7
    %v309 = vsub.s32 0, %v308
    %v310 = vrot.slane %v305, %v309
    %v311 = vlaneseq
    %v312 = vshrl.u32 %v311, 7
    %v313 = vsub.s32 1, %v312
    %v314 = vrot.slane %v305, %v313
    %v333 = vunpack.c.l.b16 %v289
    %v334 = vunpack.c.h.b16 %v289
    %v335 = vunpack.c.l.b16 %v290
    %v336 = vunpack.c.h.b16 %v290
    %v337 = vunpack.c.l.b16 %v291
    %v338 = vunpack.c.h.b16 %v291
    %v339 = vunpack.c.l.b16 %v292
    %v340 = vunpack.c.h.b16 %v292
    %v341 = vunpack.c.l.b16 %v293
    %v342 = vunpack.c.h.b16 %v293
    %v343 = vunpack.c.l.b16 %v294
    %v344 = vunpack.c.h.b16 %v294
    %v345 = vunpack.c.l.b16 %v295
    %v346 = vunpack.c.h.b16 %v295
    %v347 = vunpack.c.l.b16 %v296
    %v348 = vunpack.c.h.b16 %v296
    %v349 = vunpack.c.l.b16 %v297
    %v350 = vunpack.c.h.b16 %v297
    %v351 = vunpack.c.l.b16 %v298
    %v352 = vunpack.c.h.b16 %v298
    %v353 = vunpack.c.l.b16 %v299
    %v354 = vunpack.c.h.b16 %v299
    %v355 = vunpack.c.l.b16 %v300
    %v356 = vunpack.c.h.b16 %v300
    %v357 = vunpack.c.l.b16 %v301
    %v358 = vunpack.c.h.b16 %v301
    %v359 = vunpack.c.l.b16 %v302
    %v360 = vunpack.c.h.b16 %v302
    %v361 = vunpack.c.l.b16 %v303
    %v362 = vunpack.c.h.b16 %v303
    %v363 = vunpack.c.l.b16 %v304
    %v364 = vunpack.c.h.b16 %v304
    %v365 = vpack.c.b16 %v335, %v333
    %v366 = vpack.c.b16 %v336, %v334
    %v367 = vpack.c.b16 %v339, %v337
    %v368 = vpack.c.b16 %v340, %v338
    %v369 = vpack.c.b16 %v343, %v341
    %v370 = vpack.c.b16 %v344, %v342
    %v371 = vpack.c.b16 %v347, %v345
    %v372 = vpack.c.b16 %v348, %v346
    %v373 = vpack.c.b16 %v351, %v349
    %v374 = vpack.c.b16 %v352, %v350
    %v375 = vpack.c.b16 %v355, %v353
    %v376 = vpack.c.b16 %v356, %v354
    %v377 = vpack.c.b16 %v359, %v357
    %v378 = vpack.c.b16 %v360, %v358
    %v379 = vpack.c.b16 %v363, %v361
    %v380 = vpack.c.b16 %v364, %v362
    %397 = vmatprep.subr.bf16.mxu0 %v366
    %398 = vmatpush1.bf16.msra.mxu0 %v365
    %399 = vmatprep.subr.bf16.mxu0 %v368
    %400 = vmatpush1.bf16.msra.mxu0 %v367
    %401 = vmatprep.subr.bf16.mxu0 %v370
    %402 = vmatpush1.bf16.msra.mxu0 %v369
    %403 = vmatprep.subr.bf16.mxu0 %v372
    %404 = vmatpush1.bf16.msra.mxu0 %v371
    %405 = vmatprep.subr.bf16.mxu0 %v374
    %406 = vmatpush1.bf16.msra.mxu0 %v373
    %407 = vmatprep.subr.bf16.mxu0 %v376
    %408 = vmatpush1.bf16.msra.mxu0 %v375
    %409 = vmatprep.subr.bf16.mxu0 %v378
    %410 = vmatpush1.bf16.msra.mxu0 %v377
    %411 = vmatprep.subr.bf16.mxu0 %v380
    %412 = vmatpush1.bf16.msra.mxu0 %v379
    %413 = vmatprep.subr.bf16.mxu0 0
    %414 = vmatpush1.bf16.msra.mxu0 0
    %415 = vmatprep.subr.bf16.mxu0 0
    %416 = vmatpush1.bf16.msra.mxu0 0
    %417 = vmatprep.subr.bf16.mxu0 0
    %418 = vmatpush1.bf16.msra.mxu0 0
    %419 = vmatprep.subr.bf16.mxu0 0
    %420 = vmatpush1.bf16.msra.mxu0 0
    %421 = vmatprep.subr.bf16.mxu0 0
    %422 = vmatpush1.bf16.msra.mxu0 0
    %423 = vmatprep.subr.bf16.mxu0 0
    %424 = vmatpush1.bf16.msra.mxu0 0
    %425 = vmatprep.subr.bf16.mxu0 0
    %426 = vmatpush1.bf16.msra.mxu0 0
    %427 = vmatprep.subr.bf16.mxu0 0
    %428 = vmatpush1.bf16.msra.mxu0 0
    %429 = vmatprep.mubr.bf16.mxu0 0
    %430 = vmatmul.mubr.bf16.gmra.mrb[0].mxu0 %v288
    %v431 = vpop.f32.mrb[0].mxu0
    %v432 = vadd.f32 %v310, %v431
    %v433 = vpop.f32.mrb[0].mxu0
    %v434 = vadd.f32 %v314, %v433
    %v435 = vpop.f32.mrb[0].mxu0
    %v436 = vadd.f32 %v310, %v435
    %v437 = vpop.f32.mrb[0].mxu0
    %v438 = vadd.f32 %v314, %v437
    %439 = vdwg.mxu0
    %v440 = vmul.f32 %v432, 0.01
    %v441 = vmul.f32 %v434, 0.01
    %v442 = vmul.f32 %v436, 0.01
    %v443 = vmul.f32 %v438, 0.01
    %v444 = vmax.f32 %v432, %v440
    %v445 = vmax.f32 %v434, %v441
    %v446 = vmax.f32 %v436, %v442
    %v447 = vmax.f32 %v438, %v443
    %v448 = vpack.c.bf16 %v446, %v444
    %v449 = vld [vmem:[#allocation6] sm:$0xf]
    %v450 = vld [vmem:[#allocation6 + $0x4] sm:$0xf]
    %v451 = vld [vmem:[#allocation6 + $0x8] sm:$0xf]
    %v452 = vld [vmem:[#allocation6 + $0xc] sm:$0xf]
    %v453 = vld [vmem:[#allocation6 + $0x10] sm:$0xf]
    %v454 = vld [vmem:[#allocation6 + $0x14] sm:$0xf]
    %v455 = vld [vmem:[#allocation6 + $0x18] sm:$0xf]
    %v456 = vld [vmem:[#allocation6 + $0x1c] sm:$0xf]
    %v457 = vld [vmem:[#allocation6 + $0x20] sm:$0xf]
    %v458 = vld [vmem:[#allocation6 + $0x24] sm:$0xf]
    %v459 = vld [vmem:[#allocation6 + $0x28] sm:$0xf]
    %v460 = vld [vmem:[#allocation6 + $0x2c] sm:$0xf]
    %v461 = vld [vmem:[#allocation6 + $0x30] sm:$0xf]
    %v462 = vld [vmem:[#allocation6 + $0x34] sm:$0xf]
    %v463 = vld [vmem:[#allocation6 + $0x38] sm:$0xf]
    %v464 = vld [vmem:[#allocation6 + $0x3c] sm:$0xf]
    %v465 = vld [vmem:[%s8] sm:$0x1]
    %v467 = vlaneseq
    %v468 = vshrl.u32 %v467, 7
    %v469 = vsub.s32 0, %v468
    %v470 = vrot.slane %v465, %v469
    %v488 = vunpack.c.l.b16 %v449
    %v489 = vunpack.c.l.b16 %v450
    %v490 = vunpack.c.l.b16 %v451
    %v491 = vunpack.c.l.b16 %v452
    %v492 = vunpack.c.l.b16 %v453
    %v493 = vunpack.c.l.b16 %v454
    %v494 = vunpack.c.l.b16 %v455
    %v495 = vunpack.c.l.b16 %v456
    %v496 = vunpack.c.l.b16 %v457
    %v497 = vunpack.c.l.b16 %v458
    %v498 = vunpack.c.l.b16 %v459
    %v499 = vunpack.c.l.b16 %v460
    %v500 = vunpack.c.l.b16 %v461
    %v501 = vunpack.c.l.b16 %v462
    %v502 = vunpack.c.l.b16 %v463
    %v503 = vunpack.c.l.b16 %v464
    %v504 = vpack.c.b16 %v489, %v488
    %v505 = vpack.c.b16 %v491, %v490
    %v506 = vpack.c.b16 %v493, %v492
    %v507 = vpack.c.b16 %v495, %v494
    %v508 = vpack.c.b16 %v497, %v496
    %v509 = vpack.c.b16 %v499, %v498
    %v510 = vpack.c.b16 %v501, %v500
    %v511 = vpack.c.b16 %v503, %v502
    %520 = vmatprep.subr.bf16.mxu0 0
    %521 = vmatpush1.bf16.msra.mxu0 %v504
    %522 = vmatprep.subr.bf16.mxu0 0
    %523 = vmatpush1.bf16.msra.mxu0 %v505
    %524 = vmatprep.subr.bf16.mxu0 0
    %525 = vmatpush1.bf16.msra.mxu0 %v506
    %526 = vmatprep.subr.bf16.mxu0 0
    %527 = vmatpush1.bf16.msra.mxu0 %v507
    %528 = vmatprep.subr.bf16.mxu0 0
    %529 = vmatpush1.bf16.msra.mxu0 %v508
    %530 = vmatprep.subr.bf16.mxu0 0
    %531 = vmatpush1.bf16.msra.mxu0 %v509
    %532 = vmatprep.subr.bf16.mxu0 0
    %533 = vmatpush1.bf16.msra.mxu0 %v510
    %534 = vmatprep.subr.bf16.mxu0 0
    %535 = vmatpush1.bf16.msra.mxu0 %v511
    %536 = vmatprep.subr.bf16.mxu0 0
    %537 = vmatpush1.bf16.msra.mxu0 0
    %538 = vmatprep.subr.bf16.mxu0 0
    %539 = vmatpush1.bf16.msra.mxu0 0
    %540 = vmatprep.subr.bf16.mxu0 0
    %541 = vmatpush1.bf16.msra.mxu0 0
    %542 = vmatprep.subr.bf16.mxu0 0
    %543 = vmatpush1.bf16.msra.mxu0 0
    %544 = vmatprep.subr.bf16.mxu0 0
    %545 = vmatpush1.bf16.msra.mxu0 0
    %546 = vmatprep.subr.bf16.mxu0 0
    %547 = vmatpush1.bf16.msra.mxu0 0
    %548 = vmatprep.subr.bf16.mxu0 0
    %549 = vmatpush1.bf16.msra.mxu0 0
    %550 = vmatprep.subr.bf16.mxu0 0
    %551 = vmatpush1.bf16.msra.mxu0 0
    %552 = vmatprep.mubr.bf16.mxu0 0
    %553 = vmatmul.mubr.bf16.gmra.mrb[0].mxu0 %v448
    %v554 = vpop.f32.mrb[0].mxu0
    %v555 = vadd.f32 %v470, %v554
    %v556 = vpop.f32.mrb[0].mxu0
    %v557 = vpop.f32.mrb[0].mxu0
    %v558 = vadd.f32 %v470, %v557
    %v559 = vpop.f32.mrb[0].mxu0
    %560 = vdwg.mxu0
    %561 = vmax.xlane.f32.xlu0 %v555
    %v562 = vpop.xlane.xlu0 %561
    %563 = vmax.xlane.f32.xlu0 %v558
    %v564 = vpop.xlane.xlu0 %563
    %v565 = vsub.f32 %v555, %v562
    %v566 = vsub.f32 %v558, %v564
    %v567 = vmul.f32 %v565, 1.442695
    %v568 = vpow.pop %v567
    %v569 = vmul.f32 %v566, 1.442695
    %v570 = vpow.pop %v569
    %571 = vadd.xlane.f32.xlu0 %v568
    %v572 = vpop.xlane.xlu0 %571
    %573 = vadd.xlane.f32.xlu0 %v570
    %v574 = vpop.xlane.xlu0 %573
    %v575 = vrcp.pop %v572
    %v576 = vrcp.pop %v574
    %v577 = vmul.f32 %v568, %v575
    %v578 = vmul.f32 %v570, %v576
    %v579 = vpack.c.bf16 %v578, %v577
    %v580 = vld [vmem:[#allocation7] sm:$0xf]
    %v581 = vld [vmem:[#allocation7 + $0x4] sm:$0xf]
    %v582 = vld [vmem:[#allocation7 + $0x8] sm:$0xf]
    %v583 = vld [vmem:[#allocation7 + $0xc] sm:$0xf]
    %v584 = vld [vmem:[#allocation7 + $0x10] sm:$0xf]
    %v585 = vld [vmem:[#allocation7 + $0x14] sm:$0xf]
    %v586 = vld [vmem:[#allocation7 + $0x18] sm:$0xf]
    %v587 = vld [vmem:[#allocation7 + $0x1c] sm:$0xf]
    %v588 = vld [vmem:[#allocation7 + $0x20] sm:$0xf]
    %v589 = vld [vmem:[#allocation7 + $0x24] sm:$0xf]
    %v590 = vld [vmem:[#allocation7 + $0x28] sm:$0xf]
    %v591 = vld [vmem:[#allocation7 + $0x2c] sm:$0xf]
    %v592 = vld [vmem:[#allocation7 + $0x30] sm:$0xf]
    %v593 = vld [vmem:[#allocation7 + $0x34] sm:$0xf]
    %v594 = vld [vmem:[#allocation7 + $0x38] sm:$0xf]
    %v595 = vld [vmem:[#allocation7 + $0x3c] sm:$0xf]
    %v596 = vld [vmem:[%s10] sm:$0x1]
    %v598 = vlaneseq
    %v599 = vshrl.u32 %v598, 7
    %v600 = vsub.s32 0, %v599
    %v601 = vrot.slane %v596, %v600
    %v619 = vunpack.c.l.b16 %v580
    %v620 = vunpack.c.l.b16 %v581
    %v621 = vunpack.c.l.b16 %v582
    %v622 = vunpack.c.l.b16 %v583
    %v623 = vunpack.c.l.b16 %v584
    %v624 = vunpack.c.l.b16 %v585
    %v625 = vunpack.c.l.b16 %v586
    %v626 = vunpack.c.l.b16 %v587
    %v627 = vunpack.c.l.b16 %v588
    %v628 = vunpack.c.l.b16 %v589
    %v629 = vunpack.c.l.b16 %v590
    %v630 = vunpack.c.l.b16 %v591
    %v631 = vunpack.c.l.b16 %v592
    %v632 = vunpack.c.l.b16 %v593
    %v633 = vunpack.c.l.b16 %v594
    %v634 = vunpack.c.l.b16 %v595
    %v635 = vpack.c.b16 %v620, %v619
    %v636 = vpack.c.b16 %v622, %v621
    %v637 = vpack.c.b16 %v624, %v623
    %v638 = vpack.c.b16 %v626, %v625
    %v639 = vpack.c.b16 %v628, %v627
    %v640 = vpack.c.b16 %v630, %v629
    %v641 = vpack.c.b16 %v632, %v631
    %v642 = vpack.c.b16 %v634, %v633
    %651 = vmatprep.subr.bf16.mxu0 0
    %652 = vmatpush1.bf16.msra.mxu0 %v635
    %653 = vmatprep.subr.bf16.mxu0 0
    %654 = vmatpush1.bf16.msra.mxu0 %v636
    %655 = vmatprep.subr.bf16.mxu0 0
    %656 = vmatpush1.bf16.msra.mxu0 %v637
    %657 = vmatprep.subr.bf16.mxu0 0
    %658 = vmatpush1.bf16.msra.mxu0 %v638
    %659 = vmatprep.subr.bf16.mxu0 0
    %660 = vmatpush1.bf16.msra.mxu0 %v639
    %661 = vmatprep.subr.bf16.mxu0 0
    %662 = vmatpush1.bf16.msra.mxu0 %v640
    %663 = vmatprep.subr.bf16.mxu0 0
    %664 = vmatpush1.bf16.msra.mxu0 %v641
    %665 = vmatprep.subr.bf16.mxu0 0
    %666 = vmatpush1.bf16.msra.mxu0 %v642
    %667 = vmatprep.subr.bf16.mxu0 0
    %668 = vmatpush1.bf16.msra.mxu0 0
    %669 = vmatprep.subr.bf16.mxu0 0
    %670 = vmatpush1.bf16.msra.mxu0 0
    %671 = vmatprep.subr.bf16.mxu0 0
    %672 = vmatpush1.bf16.msra.mxu0 0
    %673 = vmatprep.subr.bf16.mxu0 0
    %674 = vmatpush1.bf16.msra.mxu0 0
    %675 = vmatprep.subr.bf16.mxu0 0
    %676 = vmatpush1.bf16.msra.mxu0 0
    %677 = vmatprep.subr.bf16.mxu0 0
    %678 = vmatpush1.bf16.msra.mxu0 0
    %679 = vmatprep.subr.bf16.mxu0 0
    %680 = vmatpush1.bf16.msra.mxu0 0
    %681 = vmatprep.subr.bf16.mxu0 0
    %682 = vmatpush1.bf16.msra.mxu0 0
    %683 = vmatprep.mubr.bf16.mxu0 0
    %684 = vmatmul.mubr.bf16.gmra.mrb[0].mxu0 %v579
    %v685 = vpop.f32.mrb[0].mxu0
    %v686 = vadd.f32 %v601, %v685
    %v687 = vpop.f32.mrb[0].mxu0
    %v688 = vpop.f32.mrb[0].mxu0
    %v689 = vadd.f32 %v601, %v688
    %v690 = vpop.f32.mrb[0].mxu0
    %691 = vdwg.mxu0
    %v692 = vmul.f32 %v686, 0.01
    %v693 = vmul.f32 %v689, 0.01
    %v694 = vmax.f32 %v686, %v692
    %v695 = vmax.f32 %v689, %v693
    %v696 = vadd.f32 %v445, %v694
    %v697 = vadd.f32 %v447, %v695
    %v698 = vmax.f32 %v696, 0.0
    %v699 = vmax.f32 %v697, 0.0
    %v700 = vld [vmem:[%s11] sm:$0x1]
    %v702 = vlaneseq
    %v703 = vshrl.u32 %v702, 7
    %v704 = vsub.s32 0, %v703
    %v705 = vrot.slane %v700, %v704
    %v707 = vmul.f32 %v698, %v705
    %v708 = vmul.f32 %v699, %v705
    %709 = vadd.xlane.f32.xlu0 %v707
    %v710 = vpop.xlane.xlu0 %709
    %711 = vadd.xlane.f32.xlu0 %v708
    %v712 = vpop.xlane.xlu0 %711
    %v713 = vld [vmem:[%s12] sm:$0x1]
    %v715 = vlaneseq
    %v716 = vshrl.u32 %v715, 7
    %v717 = vsub.s32 0, %v716
    %v718 = vrot.slane %v713, %v717
    %v720 = vadd.f32 %v710, %v718
    %v721 = vadd.f32 %v712, %v718
    %v722 = vlaneseq
    %v723 = vand.u32 %v722, 127
    %vm724 = vcmp.eq.s32.totalorder %v723, 4
    %726 = vset.pattern.permute.xlu0 0
    %727 = vperm.xlu0 %726, %v720
    %v728 = vpop.permute.xlu0 %727
    %731 = vset.pattern.permute.xlu0 0
    %732 = vperm.xlu0 %731, %v721
    %v733 = vpop.permute.xlu0 %732
    %v735 = vsel %vm724, %v728, %v577
    %v736 = vsel %vm724, %v733, %v578
    %737 = vst [vmem:[%s13] sm:$0xff] %v735
    %738 = vst [vmem:[%s13 + $0x8] sm:$0xff] %v736
    // Predicated region
    $region70: #{forward.1} parent=1 // pred_check
      _
    $region71: #{forward.1} parent=1 // pred_check_branch
      %740 = sbr.rel (0) target = $region73
    $region72: #{forward.1} parent=1 // pred_region
      _
    $region73: #{forward.1} parent=1 // pred_fallthru
      _
    // Predicated region
    $region74: #{forward.1} parent=1 // pred_check
      _
    $region75: #{forward.1} parent=1 // pred_check_branch
      %742 = sbr.rel (0) target = $region77
    $region76: #{forward.1} parent=1 // pred_region
      _
    $region77: #{forward.1} parent=1 // pred_fallthru
      _
    %743 = vsyncpa [#allocation3], 1
    %744 = vsyncpa [#allocation5], 1
    %745 = vsyncpa [#allocation8], 1

</llo_original>
